<compile_context>
chip_gen: v7x
topology: tpu7x:2x2x1
jax: 0.10.0
libtpu: 0.0.40
codegen_flags: <defaults>
</compile_context>

<pallas_src>
import jax
import jax.numpy as jnp
from jax.experimental import pallas as pl
from jax.experimental.pallas import tpu as pltpu

HIDDEN_SIZE = 20      # hidden_size in the PyTorch script
HIDDEN_SIZE2 = 1024   # hidden_size2 in the PyTorch script
BN_EPS = 1e-5


def _round_up(a, m):
    return ((a + m - 1) // m) * m


def linear_probe_kernel(x_ref, w1_ref, w2_ref, b2_ref, w3t_ref, b3_ref, o_ref):
    # x_ref: (bm, D+1) f32, last column == 1.0 (bias lane); weights are bf16 with BN folded.
    x = x_ref[...].astype(jnp.bfloat16)                     # in-kernel cast (hides under MXU)

    # ----- linear1 (+ folded BN + folded bias via ones column) -> ReLU, bf16 epilogue -----
    h = jnp.dot(x, w1_ref[...], preferred_element_type=jnp.float32)   # (bm, H2) f32
    h = jnp.maximum(h.astype(jnp.bfloat16), 0.0)                      # packed bf16 ReLU

    # ----- linear2 (+ folded BN) -> ReLU (small (bm, 128) epilogue) -----
    h2 = jnp.dot(h, w2_ref[...], preferred_element_type=jnp.float32) + b2_ref[...]
    h2 = jnp.maximum(h2, 0.0).astype(jnp.bfloat16)

    # ----- linear3, lane-dense: (1, Hp) . (bm, Hp)^T -> (1, bm) -----
    o = jax.lax.dot_general(
        w3t_ref[...], h2,
        dimension_numbers=(((1,), (1,)), ((), ())),
        preferred_element_type=jnp.float32,
    )
    o_ref[...] = o + b3_ref[0, 0]


def linear_probe_forward(x, params, *, block_m=None):
    """x: (B, input_dim) float32.  Returns (B, 1) float32 (eval-mode forward)."""
    B, D = x.shape
    H2 = params["w1"].shape[1]
    H = params["w2"].shape[1]
    Hp = _round_up(H, 128)                                   # lane-pad narrow hidden dim

    # ---- Fold eval-mode BatchNorm into the adjacent Linear (exact) ----
    s1 = params["g1"] * jax.lax.rsqrt(params["v1"] + BN_EPS)            # (1, H2)
    w1f = params["w1"] * s1                                              # (D, H2)
    b1f = (params["b1"] - params["m1"]) * s1 + params["be1"]             # (1, H2)
    # Fold b1 into the matmul: extra weight row multiplied by the ones column of x.
    w1a = jnp.concatenate([w1f, b1f], axis=0).astype(jnp.bfloat16)       # (D+1, H2)

    s2 = params["g2"] * jax.lax.rsqrt(params["v2"] + BN_EPS)             # (1, H)
    w2f = params["w2"] * s2                                              # (H2, H)
    b2f = (params["b2"] - params["m2"]) * s2 + params["be2"]             # (1, H)
    w2p = jnp.pad(w2f, ((0, 0), (0, Hp - H))).astype(jnp.bfloat16)       # (H2, Hp)
    b2p = jnp.pad(b2f, ((0, 0), (0, Hp - H))).astype(jnp.float32)        # (1, Hp)
    w3t = jnp.pad(params["w3"].T, ((0, 0), (0, Hp - H))).astype(jnp.bfloat16)  # (1, Hp)
    b3 = params["b3"].reshape(1, 1).astype(jnp.float32)                  # scalar, SMEM

    # ---- Adaptive batch tile ----
    #  - small B: single full-block tile, only pad to the bf16 sublane pack (16).
    #  - medium B: aim for >=2 grid steps (v7x megacore / pipelining), 128-aligned blocks.
    #  - large B: 512-row tiles (well inside VMEM on all generations).
    if block_m is None:
        if B <= 128:
            block_m = _round_up(B, 16)
        elif B <= 1024:
            block_m = _round_up(-(-B // 2), 128)
        else:
            block_m = 512
    num_tiles = -(-B // block_m)
    B_pad = num_tiles * block_m
    Da = D + 1

    # Single pad pass: append the ones (bias) column and pad batch rows.
    # Padded rows also become 1.0 — their outputs are discarded below.
    xa = jnp.pad(x.astype(jnp.float32), ((0, B_pad - B), (0, 1)), constant_values=1.0)

    full = lambda shape: pl.BlockSpec(shape, lambda i: (0, 0))           # resident params
    in_specs = [
        pl.BlockSpec((block_m, Da), lambda i: (i, 0)),                   # x (+ ones col), tiled
        full((Da, H2)),                                                  # w1 (BN + bias folded)
        full((H2, Hp)),                                                  # w2 (BN folded, lane-padded)
        full((1, Hp)),                                                   # b2 (BN folded, lane-padded)
        full((1, Hp)),                                                   # w3^T (lane-padded)
        pl.BlockSpec(memory_space=pltpu.MemorySpace.SMEM),               # b3 scalar
    ]
    out_spec = pl.BlockSpec((1, block_m), lambda i: (0, i))              # lane-dense output

    out = pl.pallas_call(
        linear_probe_kernel,
        out_shape=jax.ShapeDtypeStruct((1, B_pad), jnp.float32),
        grid=(num_tiles,),
        in_specs=in_specs,
        out_specs=out_spec,
        compiler_params=pltpu.CompilerParams(
            dimension_semantics=("parallel",)),
    )(xa, w1a, w2p, b2p, w3t, b3)

    return out[0, :B].reshape(B, 1)


def make_params(key, input_dim, hidden_size, hidden_size2):
    """Deterministic synthetic parameters (shapes match the PyTorch module)."""
    ks = jax.random.split(key, 10)
    f32 = jnp.float32

    def lin_init(k, fan_in, fan_out):
        bound = 1.0 / jnp.sqrt(fan_in)
        kw, kb = jax.random.split(k)
        w = jax.random.uniform(kw, (fan_in, fan_out), f32, -bound, bound)
        b = jax.random.uniform(kb, (1, fan_out), f32, -bound, bound)
        return w, b

    w1, b1 = lin_init(ks[0], input_dim, hidden_size2)
    w2, b2 = lin_init(ks[1], hidden_size2, hidden_size)
    w3, b3 = lin_init(ks[2], hidden_size, 1)

    # BatchNorm1d(hidden_size2) -> "batchnorm2" in the module
    g1 = 1.0 + 0.1 * jax.random.normal(ks[3], (1, hidden_size2), f32)
    be1 = 0.1 * jax.random.normal(ks[4], (1, hidden_size2), f32)
    m1 = 0.05 * jax.random.normal(ks[5], (1, hidden_size2), f32)
    v1 = 1.0 + 0.1 * jax.random.uniform(ks[6], (1, hidden_size2), f32)

    # BatchNorm1d(hidden_size) -> "batchnorm" in the module
    g2 = 1.0 + 0.1 * jax.random.normal(ks[7], (1, hidden_size), f32)
    be2 = 0.1 * jax.random.normal(ks[8], (1, hidden_size), f32)
    m2 = 0.05 * jax.random.normal(ks[9], (1, hidden_size), f32)
    v2 = 1.0 + 0.1 * jax.random.uniform(jax.random.fold_in(key, 99), (1, hidden_size), f32)

    return dict(w1=w1, b1=b1, g1=g1, be1=be1, m1=m1, v1=v1,
                w2=w2, b2=b2, g2=g2, be2=be2, m2=m2, v2=v2,
                w3=w3, b3=b3)


def reference_forward(x, p):
    """Full-precision eval-mode reference (unfolded BN)."""
    h = x @ p["w1"] + p["b1"]
    h = (h - p["m1"]) / jnp.sqrt(p["v1"] + BN_EPS) * p["g1"] + p["be1"]
    h = jnp.maximum(h, 0.0)
    h2 = h @ p["w2"] + p["b2"]
    h2 = (h2 - p["m2"]) / jnp.sqrt(p["v2"] + BN_EPS) * p["g2"] + p["be2"]
    h2 = jnp.maximum(h2, 0.0)
    return h2 @ p["w3"] + p["b3"]


if __name__ == "__main__":
    batch = 8
    input_dim = 32

    key = jax.random.PRNGKey(0)
    kx, kp = jax.random.split(key)
    x = jax.random.normal(kx, (batch, input_dim), jnp.float32)
    params = make_params(kp, input_dim, HIDDEN_SIZE, HIDDEN_SIZE2)

    out = jax.block_until_ready(linear_probe_forward(x, params))
    ref = reference_forward(x, params)

    assert out.shape == (batch, 1), out.shape
    # bf16 matmul operands -> relaxed tolerance vs. the f32 reference.
    assert jnp.allclose(out, ref, atol=5e-2, rtol=5e-2), "mismatch vs reference"
    print("KERNEL_OK")
</pallas_src>

<mosaic_0001>
module attributes {stable_mosaic.version = 11 : i64} {
  func.func @linear_probe_kernel(%arg0: i32, %arg1: memref<16x33xf32, #tpu.memory_space<vmem>>, %arg2: memref<33x1024xbf16, #tpu.memory_space<vmem>>, %arg3: memref<1024x128xbf16, #tpu.memory_space<vmem>>, %arg4: memref<1x128xf32, #tpu.memory_space<vmem>>, %arg5: memref<1x128xbf16, #tpu.memory_space<vmem>>, %arg6: memref<1x1xf32, #tpu.memory_space<smem>>, %arg7: memref<1x16xf32, #tpu.memory_space<vmem>>) attributes {dimension_semantics = [#tpu.dimension_semantics<parallel>], iteration_bounds = array<i64: 1>, scalar_prefetch = 0 : i64, scratch_operands = 0 : i64, tpu.core_type = #tpu.core_type<tc>, window_params = [{transform_indices = @transform_0, window_bounds = array<i64: 16, 33>}, {pipeline_mode = #tpu.pipeline_mode<synchronous>, transform_indices = @transform_1, window_bounds = array<i64: 33, 1024>}, {pipeline_mode = #tpu.pipeline_mode<synchronous>, transform_indices = @transform_2, window_bounds = array<i64: 1024, 128>}, {pipeline_mode = #tpu.pipeline_mode<synchronous>, transform_indices = @transform_3, window_bounds = array<i64: 1, 128>}, {pipeline_mode = #tpu.pipeline_mode<synchronous>, transform_indices = @transform_4, window_bounds = array<i64: 1, 128>}, {transform_indices = @transform_5, window_bounds = array<i64: 1, 1>}, {transform_indices = @transform_6, window_bounds = array<i64: 1, 16>}]} {
    %c0 = arith.constant 0 : index
    %c0_0 = arith.constant 0 : index
    %0 = vector.load %arg1[%c0, %c0_0] : memref<16x33xf32, #tpu.memory_space<vmem>>, vector<16x33xf32>
    %1 = arith.truncf %0 : vector<16x33xf32> to vector<16x33xbf16>
    %c0_1 = arith.constant 0 : index
    %c0_2 = arith.constant 0 : index
    %2 = vector.load %arg2[%c0_1, %c0_2] : memref<33x1024xbf16, #tpu.memory_space<vmem>>, vector<33x1024xbf16>
    %cst = arith.constant dense<0.000000e+00> : vector<16x1024xf32>
    %3 = tpu.matmul %1, %2, %cst {dimension_numbers = #tpu.dot_dimension_numbers<[1], [0], [0], [1], [0, 0, 1, 1], [], []>} : vector<16x33xbf16>, vector<33x1024xbf16>, vector<16x1024xf32> -> vector<16x1024xf32>
    %4 = arith.truncf %3 : vector<16x1024xf32> to vector<16x1024xbf16>
    %cst_3 = arith.constant 0.000000e+00 : bf16
    %5 = vector.broadcast %cst_3 : bf16 to vector<16x1024xbf16>
    %6 = arith.maximumf %4, %5 : vector<16x1024xbf16>
    %c0_4 = arith.constant 0 : index
    %c0_5 = arith.constant 0 : index
    %7 = vector.load %arg3[%c0_4, %c0_5] : memref<1024x128xbf16, #tpu.memory_space<vmem>>, vector<1024x128xbf16>
    %cst_6 = arith.constant dense<0.000000e+00> : vector<16x128xf32>
    %8 = tpu.matmul %6, %7, %cst_6 {dimension_numbers = #tpu.dot_dimension_numbers<[1], [0], [0], [1], [0, 0, 1, 1], [], []>} : vector<16x1024xbf16>, vector<1024x128xbf16>, vector<16x128xf32> -> vector<16x128xf32>
    %c0_7 = arith.constant 0 : index
    %c0_8 = arith.constant 0 : index
    %9 = vector.load %arg4[%c0_7, %c0_8] : memref<1x128xf32, #tpu.memory_space<vmem>>, vector<1x128xf32>
    %10 = vector.broadcast %9 : vector<1x128xf32> to vector<16x128xf32>
    %11 = arith.addf %8, %10 : vector<16x128xf32>
    %cst_9 = arith.constant 0.000000e+00 : f32
    %12 = vector.broadcast %cst_9 : f32 to vector<16x128xf32>
    %13 = arith.maximumf %11, %12 : vector<16x128xf32>
    %14 = arith.truncf %13 : vector<16x128xf32> to vector<16x128xbf16>
    %c0_10 = arith.constant 0 : index
    %c0_11 = arith.constant 0 : index
    %15 = vector.load %arg5[%c0_10, %c0_11] : memref<1x128xbf16, #tpu.memory_space<vmem>>, vector<1x128xbf16>
    %cst_12 = arith.constant dense<0.000000e+00> : vector<1x16xf32>
    %16 = tpu.matmul %15, %14, %cst_12 {dimension_numbers = #tpu.dot_dimension_numbers<[1], [1], [0], [0], [0, 0, 1, 0], [], []>} : vector<1x128xbf16>, vector<16x128xbf16>, vector<1x16xf32> -> vector<1x16xf32>
    %c0_13 = arith.constant 0 : index
    %c0_14 = arith.constant 0 : index
    %17 = memref.load %arg6[%c0_13, %c0_14] : memref<1x1xf32, #tpu.memory_space<smem>>
    %18 = vector.broadcast %17 : f32 to vector<1x16xf32>
    %19 = arith.addf %16, %18 : vector<1x16xf32>
    %c0_15 = arith.constant 0 : index
    %c0_16 = arith.constant 0 : index
    %20 = vector.load %arg7[%c0_15, %c0_16] : memref<1x16xf32, #tpu.memory_space<vmem>>, vector<1x16xf32>
    tpu.vector_store %arg7[%c0_15, %c0_16], %19 {strides = array<i32>} : memref<1x16xf32, #tpu.memory_space<vmem>>, vector<1x16xf32>,
    return
  }
  func.func @transform_0(%arg0: i32) -> (i32, i32) {
    %c0_i32 = arith.constant 0 : i32
    %c0_i32_0 = arith.constant 0 : i32
    return %arg0, %c0_i32 : i32, i32
  }
  func.func @transform_1(%arg0: i32) -> (i32, i32) {
    %c0_i32 = arith.constant 0 : i32
    %c0_i32_0 = arith.constant 0 : i32
    %c0_i32_1 = arith.constant 0 : i32
    return %c0_i32, %c0_i32_0 : i32, i32
  }
  func.func @transform_2(%arg0: i32) -> (i32, i32) {
    %c0_i32 = arith.constant 0 : i32
    %c0_i32_0 = arith.constant 0 : i32
    %c0_i32_1 = arith.constant 0 : i32
    return %c0_i32, %c0_i32_0 : i32, i32
  }
  func.func @transform_3(%arg0: i32) -> (i32, i32) {
    %c0_i32 = arith.constant 0 : i32
    %c0_i32_0 = arith.constant 0 : i32
    %c0_i32_1 = arith.constant 0 : i32
    return %c0_i32, %c0_i32_0 : i32, i32
  }
  func.func @transform_4(%arg0: i32) -> (i32, i32) {
    %c0_i32 = arith.constant 0 : i32
    %c0_i32_0 = arith.constant 0 : i32
    %c0_i32_1 = arith.constant 0 : i32
    return %c0_i32, %c0_i32_0 : i32, i32
  }
  func.func @transform_5(%arg0: i32) -> (i32, i32) {
    %c0_i32 = arith.constant 0 : i32
    %c0_i32_0 = arith.constant 0 : i32
    %c0_i32_1 = arith.constant 0 : i32
    return %c0_i32, %c0_i32_0 : i32, i32
  }
  func.func @transform_6(%arg0: i32) -> (i32, i32) {
    %c0_i32 = arith.constant 0 : i32
    %c0_i32_0 = arith.constant 0 : i32
    return %c0_i32, %arg0 : i32, i32
  }
}

</mosaic_0001>

<llo_original>
// kernel: tpu_custom_call.1
$region0: #{tpu_custom_call.1}
  #allocation0 [shape = 'u32[]', space=smem, size = 0x4, offset = 0x4, fixed_abs, tag = 'smem constant byte address 0x4 - core index']
  #allocation1 [shape = 'u32[144,128]{1,0:T(1,128)}', space=vmem, size = 0x12000, scoped, tag = 'internal scratch']
  #allocation2 [shape = 'f32[1,1]{1,0:T(1,128)S(6)}', space=smem, size = 0x200, scoped, tag = 'scoped memory for tpu_custom_call.1']
  %s0 = inlined_call_operand.hbm [shape: f32[16,33], index: 0, kind: input, shape index: {}]
  %s1 = inlined_call_operand.hbm [shape: bf16[33,1024], index: 1, kind: input, shape index: {}]
  %s2 = inlined_call_operand.hbm [shape: bf16[1024,128], index: 2, kind: input, shape index: {}]
  %s3 = inlined_call_operand.vmem [shape: f32[1,128], index: 3, kind: input, shape index: {}]
  %s4 = inlined_call_operand.vmem [shape: bf16[1,128], index: 4, kind: input, shape index: {}]
  %s5 = inlined_call_operand.<no memory space> [shape: f32[1,1], index: 5, kind: input, shape index: {}]
  %s6 = inlined_call_operand.hbm [shape: f32[1,16], index: 6, kind: output, shape index: {}]
  %s7 = sld [smem:[#allocation0]]
  $region46: #{tpu_custom_call.1} parent=0
    _
  %s9 = ssub.s32 1, %s7
  %s10 = scalar_select 0, %s9, %s7
  %11 = sst [smem:[#allocation2]] %s5
  $region1: #{tpu_custom_call.1} parent=0
    #allocation3 [shape = 'u8[8192]{0}', space=vmem, size = 0x2000, scoped, tag = 'input window, operand 0, single buffered']
    #allocation4 [shape = 's32[1]{0}', space=sflag, size = 0x4, scoped, tag = 'scoped memory for tpu_custom_call.1']
    #allocation5 [shape = 's32[1]{0}', space=sflag, size = 0x4, scoped, tag = 'scoped memory for tpu_custom_call.1']
    #allocation6 [shape = 'u8[81920]{0}', space=vmem, size = 0x14000, scoped, tag = 'input window, operand 1, single buffered']
    #allocation7 [shape = 's32[1]{0}', space=sflag, size = 0x4, scoped, tag = 'scoped memory for tpu_custom_call.1']
    #allocation8 [shape = 'u8[262144]{0}', space=vmem, size = 0x40000, scoped, tag = 'input window, operand 2, single buffered']
    #allocation9 [shape = 'u8[512]{0}', space=vmem, size = 0x400, scoped, tag = 'output window, operand 0, single buffered']
    %12 = vsyncpa [#allocation4], 0
    %13 = vsyncpa [#allocation7], 0
    %14 = vsyncpa [#allocation5], 0
    // Predicated region
    $region2: #{tpu_custom_call.1} parent=1 // pred_check
      _
    $region3: #{tpu_custom_call.1} parent=1 // pred_check_branch
      %16 = sbr.rel (0) target = $region5
    $region4: #{tpu_custom_call.1} parent=1 // pred_region
      %s18 = ssub.s32 256, 256
      %19 = vsyncadd [#allocation4], %s18
      %s20 = sshll.u32 [#allocation3], 4
      %s21 = int_to_ptr.vmem [resolvable:$true] %s20
      %26 = dma.hbm_to_vmem [thread:$0]  %s0, 256, %s21, [#allocation4], 128, 128, 8
    $region5: #{tpu_custom_call.1} parent=1 // pred_fallthru
      _
    // Predicated region
    $region6: #{tpu_custom_call.1} parent=1 // pred_check
      _
    $region7: #{tpu_custom_call.1} parent=1 // pred_check_branch
      %28 = sbr.rel (0) target = $region9
    $region8: #{tpu_custom_call.1} parent=1 // pred_region
      %s30 = ssub.s32 2560, 2560
      %31 = vsyncadd [#allocation7], %s30
      %s32 = sshll.u32 [#allocation6], 4
      %s33 = int_to_ptr.vmem [resolvable:$true] %s32
      %38 = dma.hbm_to_vmem [thread:$0]  %s1, 2560, %s33, [#allocation7], 512, 512, 32
    $region9: #{tpu_custom_call.1} parent=1 // pred_fallthru
      _
    // Predicated region
    $region10: #{tpu_custom_call.1} parent=1 // pred_check
      _
    $region11: #{tpu_custom_call.1} parent=1 // pred_check_branch
      %40 = sbr.rel (0) target = $region13
    $region12: #{tpu_custom_call.1} parent=1 // pred_region
      %s42 = ssub.s32 8192, 8192
      %43 = vsyncadd [#allocation7], %s42
      %s44 = sshll.u32 [#allocation8], 4
      %s45 = int_to_ptr.vmem [resolvable:$true] %s44
      %50 = dma.hbm_to_vmem [thread:$0]  %s2, 8192, %s45, [#allocation7], 64, 64, 4
    $region13: #{tpu_custom_call.1} parent=1 // pred_fallthru
      _
    // Predicated region
    $region14: #{tpu_custom_call.1} parent=1 // pred_check
      _
    $region15: #{tpu_custom_call.1} parent=1 // pred_check_branch
      %52 = sbr.rel (0) target = $region17
    $region16: #{tpu_custom_call.1} parent=1 // pred_region
      _
    $region17: #{tpu_custom_call.1} parent=1 // pred_fallthru
      _
    // Predicated region
    $region18: #{tpu_custom_call.1} parent=1 // pred_check
      _
    $region19: #{tpu_custom_call.1} parent=1 // pred_check_branch
      %54 = sbr.rel (0) target = $region21
    $region20: #{tpu_custom_call.1} parent=1 // pred_region
      _
    $region21: #{tpu_custom_call.1} parent=1 // pred_fallthru
      _
    // Predicated region
    $region22: #{tpu_custom_call.1} parent=1 // pred_check
      _
    $region23: #{tpu_custom_call.1} parent=1 // pred_check_branch
      %56 = sbr.rel (0) target = $region25
    $region24: #{tpu_custom_call.1} parent=1 // pred_region
      _
    $region25: #{tpu_custom_call.1} parent=1 // pred_fallthru
      _
    // Predicated region
    $region26: #{tpu_custom_call.1} parent=1 // pred_check
      _
    $region27: #{tpu_custom_call.1} parent=1 // pred_check_branch
      %58 = sbr.rel (0) target = $region29
    $region28: #{tpu_custom_call.1} parent=1 // pred_region
      %59 = dma.done [#allocation4], 256
    $region29: #{tpu_custom_call.1} parent=1 // pred_fallthru
      _
    // Predicated region
    $region30: #{tpu_custom_call.1} parent=1 // pred_check
      _
    $region31: #{tpu_custom_call.1} parent=1 // pred_check_branch
      %61 = sbr.rel (0) target = $region33
    $region32: #{tpu_custom_call.1} parent=1 // pred_region
      %62 = dma.done [#allocation7], 2560
    $region33: #{tpu_custom_call.1} parent=1 // pred_fallthru
      _
    // Predicated region
    $region34: #{tpu_custom_call.1} parent=1 // pred_check
      _
    $region35: #{tpu_custom_call.1} parent=1 // pred_check_branch
      %64 = sbr.rel (0) target = $region37
    $region36: #{tpu_custom_call.1} parent=1 // pred_region
      %65 = dma.done [#allocation7], 8192
    $region37: #{tpu_custom_call.1} parent=1 // pred_fallthru
      _
    %v67 = vld [vmem:[#allocation3] sm:$0xff]
    %v68 = vld [vmem:[#allocation3 + $0x8] sm:$0xff]
    %v69 = vpack.c.bf16 %v68, %v67
    %v70 = vld [vmem:[#allocation6] sm:$0xff]
    %v71 = vld [vmem:[#allocation6 + $0x8] sm:$0xff]
    %v72 = vld [vmem:[#allocation6 + $0x10] sm:$0xff]
    %v73 = vld [vmem:[#allocation6 + $0x18] sm:$0xff]
    %v74 = vld [vmem:[#allocation6 + $0x20] sm:$0xff]
    %v75 = vld [vmem:[#allocation6 + $0x28] sm:$0xff]
    %v76 = vld [vmem:[#allocation6 + $0x30] sm:$0xff]
    %v77 = vld [vmem:[#allocation6 + $0x38] sm:$0xff]
    %v78 = vld [vmem:[#allocation6 + $0x40] sm:$0xff]
    %v79 = vld [vmem:[#allocation6 + $0x48] sm:$0xff]
    %v80 = vld [vmem:[#allocation6 + $0x50] sm:$0xff]
    %v81 = vld [vmem:[#allocation6 + $0x58] sm:$0xff]
    %v82 = vld [vmem:[#allocation6 + $0x60] sm:$0xff]
    %v83 = vld [vmem:[#allocation6 + $0x68] sm:$0xff]
    %v84 = vld [vmem:[#allocation6 + $0x70] sm:$0xff]
    %v85 = vld [vmem:[#allocation6 + $0x78] sm:$0xff]
    %v86 = vld [vmem:[#allocation6 + $0x80] sm:$0x11]
    %v87 = vld [vmem:[#allocation6 + $0x88] sm:$0x11]
    %v88 = vld [vmem:[#allocation6 + $0x90] sm:$0x11]
    %v89 = vld [vmem:[#allocation6 + $0x98] sm:$0x11]
    %v110 = vunpack.c.l.b16 %v70
    %v111 = vunpack.c.h.b16 %v70
    %v112 = vunpack.c.l.b16 %v71
    %v113 = vunpack.c.h.b16 %v71
    %v114 = vunpack.c.l.b16 %v72
    %v115 = vunpack.c.h.b16 %v72
    %v116 = vunpack.c.l.b16 %v73
    %v117 = vunpack.c.h.b16 %v73
    %v118 = vunpack.c.l.b16 %v74
    %v119 = vunpack.c.h.b16 %v74
    %v120 = vunpack.c.l.b16 %v75
    %v121 = vunpack.c.h.b16 %v75
    %v122 = vunpack.c.l.b16 %v76
    %v123 = vunpack.c.h.b16 %v76
    %v124 = vunpack.c.l.b16 %v77
    %v125 = vunpack.c.h.b16 %v77
    %v126 = vunpack.c.l.b16 %v78
    %v127 = vunpack.c.h.b16 %v78
    %v128 = vunpack.c.l.b16 %v79
    %v129 = vunpack.c.h.b16 %v79
    %v130 = vunpack.c.l.b16 %v80
    %v131 = vunpack.c.h.b16 %v80
    %v132 = vunpack.c.l.b16 %v81
    %v133 = vunpack.c.h.b16 %v81
    %v134 = vunpack.c.l.b16 %v82
    %v135 = vunpack.c.h.b16 %v82
    %v136 = vunpack.c.l.b16 %v83
    %v137 = vunpack.c.h.b16 %v83
    %v138 = vunpack.c.l.b16 %v84
    %v139 = vunpack.c.h.b16 %v84
    %v140 = vunpack.c.l.b16 %v85
    %v141 = vunpack.c.h.b16 %v85
    %v142 = vunpack.c.l.b16 %v86
    %v143 = vunpack.c.h.b16 %v86
    %v144 = vunpack.c.l.b16 %v87
    %v145 = vunpack.c.h.b16 %v87
    %v146 = vunpack.c.l.b16 %v88
    %v147 = vunpack.c.h.b16 %v88
    %v148 = vunpack.c.l.b16 %v89
    %v149 = vunpack.c.h.b16 %v89
    %v150 = vpack.c.b16 %v118, %v110
    %v151 = vpack.c.b16 %v119, %v111
    %v152 = vpack.c.b16 %v120, %v112
    %v153 = vpack.c.b16 %v121, %v113
    %v154 = vpack.c.b16 %v122, %v114
    %v155 = vpack.c.b16 %v123, %v115
    %v156 = vpack.c.b16 %v124, %v116
    %v157 = vpack.c.b16 %v125, %v117
    %v158 = vpack.c.b16 %v134, %v126
    %v159 = vpack.c.b16 %v135, %v127
    %v160 = vpack.c.b16 %v136, %v128
    %v161 = vpack.c.b16 %v137, %v129
    %v162 = vpack.c.b16 %v138, %v130
    %v163 = vpack.c.b16 %v139, %v131
    %v164 = vpack.c.b16 %v140, %v132
    %v165 = vpack.c.b16 %v141, %v133
    %v166 = vpack.c.b16 %v142, %v142
    %v167 = vpack.c.b16 %v143, %v143
    %v168 = vpack.c.b16 %v144, %v144
    %v169 = vpack.c.b16 %v145, %v145
    %v170 = vpack.c.b16 %v146, %v146
    %v171 = vpack.c.b16 %v147, %v147
    %v172 = vpack.c.b16 %v148, %v148
    %v173 = vpack.c.b16 %v149, %v149
    %vm190 = vcmask 269312
    %v192 = vsel %vm190, %v69, 0
    %vm194 = vcmask 1040384
    %v195 = vsel 0, 4294967295, 65535
    %v196 = vsel %vm194, %v195, 0
    %v198 = vand.u32 %v166, %v196
    %v201 = vand.u32 %v167, %v196
    %v204 = vand.u32 %v168, %v196
    %v207 = vand.u32 %v169, %v196
    %v210 = vand.u32 %v170, %v196
    %v213 = vand.u32 %v171, %v196
    %v216 = vand.u32 %v172, %v196
    %v219 = vand.u32 %v173, %v196
    %221 = vmatprep.subr.bf16.mxu0 %v151
    %222 = vmatpush1.bf16.msra.mxu0 %v150
    %223 = vmatprep.subr.bf16.mxu0 %v159
    %224 = vmatpush1.bf16.msra.mxu0 %v158
    %225 = vmatprep.subr.bf16.mxu0 %v201
    %226 = vmatpush1.bf16.msra.mxu0 %v198
    %227 = vmatprep.subr.bf16.mxu0 0
    %228 = vmatpush1.bf16.msra.mxu0 0
    %229 = vmatprep.subr.bf16.mxu0 0
    %230 = vmatpush1.bf16.msra.mxu0 0
    %231 = vmatprep.subr.bf16.mxu0 0
    %232 = vmatpush1.bf16.msra.mxu0 0
    %233 = vmatprep.subr.bf16.mxu0 0
    %234 = vmatpush1.bf16.msra.mxu0 0
    %235 = vmatprep.subr.bf16.mxu0 0
    %236 = vmatpush1.bf16.msra.mxu0 0
    %237 = vmatprep.subr.bf16.mxu0 0
    %238 = vmatpush1.bf16.msra.mxu0 0
    %239 = vmatprep.subr.bf16.mxu0 0
    %240 = vmatpush1.bf16.msra.mxu0 0
    %241 = vmatprep.subr.bf16.mxu0 0
    %242 = vmatpush1.bf16.msra.mxu0 0
    %243 = vmatprep.subr.bf16.mxu0 0
    %244 = vmatpush1.bf16.msra.mxu0 0
    %245 = vmatprep.subr.bf16.mxu0 0
    %246 = vmatpush1.bf16.msra.mxu0 0
    %247 = vmatprep.subr.bf16.mxu0 0
    %248 = vmatpush1.bf16.msra.mxu0 0
    %249 = vmatprep.subr.bf16.mxu0 0
    %250 = vmatpush1.bf16.msra.mxu0 0
    %251 = vmatprep.subr.bf16.mxu0 0
    %252 = vmatpush1.bf16.msra.mxu0 0
    %253 = vmatprep.mubr.bf16.mxu0 0
    %254 = vmatmul.mubr.bf16.gmra.mrb[0].mxu0 %v192
    %v255 = vpop.f32.mrb[0].mxu0
    %v256 = vadd.f32 0.0, %v255
    %v257 = vpop.f32.mrb[0].mxu0
    %v258 = vadd.f32 0.0, %v257
    %v259 = vpop.f32.mrb[0].mxu0
    %v260 = vadd.f32 0.0, %v259
    %v261 = vpop.f32.mrb[0].mxu0
    %v262 = vadd.f32 0.0, %v261
    %263 = vdwg.mxu0
    %264 = vmatprep.subr.bf16.mxu0 %v153
    %265 = vmatpush1.bf16.msra.mxu0 %v152
    %266 = vmatprep.subr.bf16.mxu0 %v161
    %267 = vmatpush1.bf16.msra.mxu0 %v160
    %268 = vmatprep.subr.bf16.mxu0 %v207
    %269 = vmatpush1.bf16.msra.mxu0 %v204
    %270 = vmatprep.subr.bf16.mxu0 0
    %271 = vmatpush1.bf16.msra.mxu0 0
    %272 = vmatprep.subr.bf16.mxu0 0
    %273 = vmatpush1.bf16.msra.mxu0 0
    %274 = vmatprep.subr.bf16.mxu0 0
    %275 = vmatpush1.bf16.msra.mxu0 0
    %276 = vmatprep.subr.bf16.mxu0 0
    %277 = vmatpush1.bf16.msra.mxu0 0
    %278 = vmatprep.subr.bf16.mxu0 0
    %279 = vmatpush1.bf16.msra.mxu0 0
    %280 = vmatprep.subr.bf16.mxu0 0
    %281 = vmatpush1.bf16.msra.mxu0 0
    %282 = vmatprep.subr.bf16.mxu0 0
    %283 = vmatpush1.bf16.msra.mxu0 0
    %284 = vmatprep.subr.bf16.mxu0 0
    %285 = vmatpush1.bf16.msra.mxu0 0
    %286 = vmatprep.subr.bf16.mxu0 0
    %287 = vmatpush1.bf16.msra.mxu0 0
    %288 = vmatprep.subr.bf16.mxu0 0
    %289 = vmatpush1.bf16.msra.mxu0 0
    %290 = vmatprep.subr.bf16.mxu0 0
    %291 = vmatpush1.bf16.msra.mxu0 0
    %292 = vmatprep.subr.bf16.mxu0 0
    %293 = vmatpush1.bf16.msra.mxu0 0
    %294 = vmatprep.subr.bf16.mxu0 0
    %295 = vmatpush1.bf16.msra.mxu0 0
    %296 = vmatprep.mubr.bf16.mxu0 0
    %297 = vmatmul.mubr.bf16.gmra.mrb[0].mxu0 %v192
    %v298 = vpop.f32.mrb[0].mxu0
    %v299 = vadd.f32 0.0, %v298
    %v300 = vpop.f32.mrb[0].mxu0
    %v301 = vadd.f32 0.0, %v300
    %v302 = vpop.f32.mrb[0].mxu0
    %v303 = vadd.f32 0.0, %v302
    %v304 = vpop.f32.mrb[0].mxu0
    %v305 = vadd.f32 0.0, %v304
    %306 = vdwg.mxu0
    %307 = vmatprep.subr.bf16.mxu0 %v155
    %308 = vmatpush1.bf16.msra.mxu0 %v154
    %309 = vmatprep.subr.bf16.mxu0 %v163
    %310 = vmatpush1.bf16.msra.mxu0 %v162
    %311 = vmatprep.subr.bf16.mxu0 %v213
    %312 = vmatpush1.bf16.msra.mxu0 %v210
    %313 = vmatprep.subr.bf16.mxu0 0
    %314 = vmatpush1.bf16.msra.mxu0 0
    %315 = vmatprep.subr.bf16.mxu0 0
    %316 = vmatpush1.bf16.msra.mxu0 0
    %317 = vmatprep.subr.bf16.mxu0 0
    %318 = vmatpush1.bf16.msra.mxu0 0
    %319 = vmatprep.subr.bf16.mxu0 0
    %320 = vmatpush1.bf16.msra.mxu0 0
    %321 = vmatprep.subr.bf16.mxu0 0
    %322 = vmatpush1.bf16.msra.mxu0 0
    %323 = vmatprep.subr.bf16.mxu0 0
    %324 = vmatpush1.bf16.msra.mxu0 0
    %325 = vmatprep.subr.bf16.mxu0 0
    %326 = vmatpush1.bf16.msra.mxu0 0
    %327 = vmatprep.subr.bf16.mxu0 0
    %328 = vmatpush1.bf16.msra.mxu0 0
    %329 = vmatprep.subr.bf16.mxu0 0
    %330 = vmatpush1.bf16.msra.mxu0 0
    %331 = vmatprep.subr.bf16.mxu0 0
    %332 = vmatpush1.bf16.msra.mxu0 0
    %333 = vmatprep.subr.bf16.mxu0 0
    %334 = vmatpush1.bf16.msra.mxu0 0
    %335 = vmatprep.subr.bf16.mxu0 0
    %336 = vmatpush1.bf16.msra.mxu0 0
    %337 = vmatprep.subr.bf16.mxu0 0
    %338 = vmatpush1.bf16.msra.mxu0 0
    %339 = vmatprep.mubr.bf16.mxu0 0
    %340 = vmatmul.mubr.bf16.gmra.mrb[0].mxu0 %v192
    %v341 = vpop.f32.mrb[0].mxu0
    %v342 = vadd.f32 0.0, %v341
    %v343 = vpop.f32.mrb[0].mxu0
    %v344 = vadd.f32 0.0, %v343
    %v345 = vpop.f32.mrb[0].mxu0
    %v346 = vadd.f32 0.0, %v345
    %v347 = vpop.f32.mrb[0].mxu0
    %v348 = vadd.f32 0.0, %v347
    %349 = vdwg.mxu0
    %350 = vmatprep.subr.bf16.mxu0 %v157
    %351 = vmatpush1.bf16.msra.mxu0 %v156
    %352 = vmatprep.subr.bf16.mxu0 %v165
    %353 = vmatpush1.bf16.msra.mxu0 %v164
    %354 = vmatprep.subr.bf16.mxu0 %v219
    %355 = vmatpush1.bf16.msra.mxu0 %v216
    %356 = vmatprep.subr.bf16.mxu0 0
    %357 = vmatpush1.bf16.msra.mxu0 0
    %358 = vmatprep.subr.bf16.mxu0 0
    %359 = vmatpush1.bf16.msra.mxu0 0
    %360 = vmatprep.subr.bf16.mxu0 0
    %361 = vmatpush1.bf16.msra.mxu0 0
    %362 = vmatprep.subr.bf16.mxu0 0
    %363 = vmatpush1.bf16.msra.mxu0 0
    %364 = vmatprep.subr.bf16.mxu0 0
    %365 = vmatpush1.bf16.msra.mxu0 0
    %366 = vmatprep.subr.bf16.mxu0 0
    %367 = vmatpush1.bf16.msra.mxu0 0
    %368 = vmatprep.subr.bf16.mxu0 0
    %369 = vmatpush1.bf16.msra.mxu0 0
    %370 = vmatprep.subr.bf16.mxu0 0
    %371 = vmatpush1.bf16.msra.mxu0 0
    %372 = vmatprep.subr.bf16.mxu0 0
    %373 = vmatpush1.bf16.msra.mxu0 0
    %374 = vmatprep.subr.bf16.mxu0 0
    %375 = vmatpush1.bf16.msra.mxu0 0
    %376 = vmatprep.subr.bf16.mxu0 0
    %377 = vmatpush1.bf16.msra.mxu0 0
    %378 = vmatprep.subr.bf16.mxu0 0
    %379 = vmatpush1.bf16.msra.mxu0 0
    %380 = vmatprep.subr.bf16.mxu0 0
    %381 = vmatpush1.bf16.msra.mxu0 0
    %382 = vmatprep.mubr.bf16.mxu0 0
    %383 = vmatmul.mubr.bf16.gmra.mrb[0].mxu0 %v192
    %v384 = vpop.f32.mrb[0].mxu0
    %v385 = vadd.f32 0.0, %v384
    %v386 = vpop.f32.mrb[0].mxu0
    %v387 = vadd.f32 0.0, %v386
    %v388 = vpop.f32.mrb[0].mxu0
    %v389 = vadd.f32 0.0, %v388
    %v390 = vpop.f32.mrb[0].mxu0
    %v391 = vadd.f32 0.0, %v390
    %392 = vdwg.mxu0
    %v393 = vpack.c.bf16 %v260, %v256
    %v394 = vpack.c.bf16 %v262, %v258
    %v395 = vpack.c.bf16 %v303, %v299
    %v396 = vpack.c.bf16 %v305, %v301
    %v397 = vpack.c.bf16 %v346, %v342
    %v398 = vpack.c.bf16 %v348, %v344
    %v399 = vpack.c.bf16 %v389, %v385
    %v400 = vpack.c.bf16 %v391, %v387
    %v401 = vmax.bf16 %v393, 0
    %v402 = vmax.bf16 %v394, 0
    %v403 = vmax.bf16 %v395, 0
    %v404 = vmax.bf16 %v396, 0
    %v405 = vmax.bf16 %v397, 0
    %v406 = vmax.bf16 %v398, 0
    %v407 = vmax.bf16 %v399, 0
    %v408 = vmax.bf16 %v400, 0
    %v409 = vld [vmem:[#allocation8] sm:$0xf]
    %v410 = vld [vmem:[#allocation8 + $0x4] sm:$0xf]
    %v411 = vld [vmem:[#allocation8 + $0x8] sm:$0xf]
    %v412 = vld [vmem:[#allocation8 + $0xc] sm:$0xf]
    %v413 = vld [vmem:[#allocation8 + $0x10] sm:$0xf]
    %v414 = vld [vmem:[#allocation8 + $0x14] sm:$0xf]
    %v415 = vld [vmem:[#allocation8 + $0x18] sm:$0xf]
    %v416 = vld [vmem:[#allocation8 + $0x1c] sm:$0xf]
    %v417 = vld [vmem:[#allocation8 + $0x20] sm:$0xf]
    %v418 = vld [vmem:[#allocation8 + $0x24] sm:$0xf]
    %v419 = vld [vmem:[#allocation8 + $0x28] sm:$0xf]
    %v420 = vld [vmem:[#allocation8 + $0x2c] sm:$0xf]
    %v421 = vld [vmem:[#allocation8 + $0x30] sm:$0xf]
    %v422 = vld [vmem:[#allocation8 + $0x34] sm:$0xf]
    %v423 = vld [vmem:[#allocation8 + $0x38] sm:$0xf]
    %v424 = vld [vmem:[#allocation8 + $0x3c] sm:$0xf]
    %v425 = vld [vmem:[#allocation8 + $0x40] sm:$0xf]
    %v426 = vld [vmem:[#allocation8 + $0x44] sm:$0xf]
    %v427 = vld [vmem:[#allocation8 + $0x48] sm:$0xf]
    %v428 = vld [vmem:[#allocation8 + $0x4c] sm:$0xf]
    %v429 = vld [vmem:[#allocation8 + $0x50] sm:$0xf]
    %v430 = vld [vmem:[#allocation8 + $0x54] sm:$0xf]
    %v431 = vld [vmem:[#allocation8 + $0x58] sm:$0xf]
    %v432 = vld [vmem:[#allocation8 + $0x5c] sm:$0xf]
    %v433 = vld [vmem:[#allocation8 + $0x60] sm:$0xf]
    %v434 = vld [vmem:[#allocation8 + $0x64] sm:$0xf]
    %v435 = vld [vmem:[#allocation8 + $0x68] sm:$0xf]
    %v436 = vld [vmem:[#allocation8 + $0x6c] sm:$0xf]
    %v437 = vld [vmem:[#allocation8 + $0x70] sm:$0xf]
    %v438 = vld [vmem:[#allocation8 + $0x74] sm:$0xf]
    %v439 = vld [vmem:[#allocation8 + $0x78] sm:$0xf]
    %v440 = vld [vmem:[#allocation8 + $0x7c] sm:$0xf]
    %v441 = vld [vmem:[#allocation8 + $0x80] sm:$0xf]
    %v442 = vld [vmem:[#allocation8 + $0x84] sm:$0xf]
    %v443 = vld [vmem:[#allocation8 + $0x88] sm:$0xf]
    %v444 = vld [vmem:[#allocation8 + $0x8c] sm:$0xf]
    %v445 = vld [vmem:[#allocation8 + $0x90] sm:$0xf]
    %v446 = vld [vmem:[#allocation8 + $0x94] sm:$0xf]
    %v447 = vld [vmem:[#allocation8 + $0x98] sm:$0xf]
    %v448 = vld [vmem:[#allocation8 + $0x9c] sm:$0xf]
    %v449 = vld [vmem:[#allocation8 + $0xa0] sm:$0xf]
    %v450 = vld [vmem:[#allocation8 + $0xa4] sm:$0xf]
    %v451 = vld [vmem:[#allocation8 + $0xa8] sm:$0xf]
    %v452 = vld [vmem:[#allocation8 + $0xac] sm:$0xf]
    %v453 = vld [vmem:[#allocation8 + $0xb0] sm:$0xf]
    %v454 = vld [vmem:[#allocation8 + $0xb4] sm:$0xf]
    %v455 = vld [vmem:[#allocation8 + $0xb8] sm:$0xf]
    %v456 = vld [vmem:[#allocation8 + $0xbc] sm:$0xf]
    %v457 = vld [vmem:[#allocation8 + $0xc0] sm:$0xf]
    %v458 = vld [vmem:[#allocation8 + $0xc4] sm:$0xf]
    %v459 = vld [vmem:[#allocation8 + $0xc8] sm:$0xf]
    %v460 = vld [vmem:[#allocation8 + $0xcc] sm:$0xf]
    %v461 = vld [vmem:[#allocation8 + $0xd0] sm:$0xf]
    %v462 = vld [vmem:[#allocation8 + $0xd4] sm:$0xf]
    %v463 = vld [vmem:[#allocation8 + $0xd8] sm:$0xf]
    %v464 = vld [vmem:[#allocation8 + $0xdc] sm:$0xf]
    %v465 = vld [vmem:[#allocation8 + $0xe0] sm:$0xf]
    %v466 = vld [vmem:[#allocation8 + $0xe4] sm:$0xf]
    %v467 = vld [vmem:[#allocation8 + $0xe8] sm:$0xf]
    %v468 = vld [vmem:[#allocation8 + $0xec] sm:$0xf]
    %v469 = vld [vmem:[#allocation8 + $0xf0] sm:$0xf]
    %v470 = vld [vmem:[#allocation8 + $0xf4] sm:$0xf]
    %v471 = vld [vmem:[#allocation8 + $0xf8] sm:$0xf]
    %v472 = vld [vmem:[#allocation8 + $0xfc] sm:$0xf]
    %v473 = vld [vmem:[#allocation8 + $0x100] sm:$0xf]
    %v474 = vld [vmem:[#allocation8 + $0x104] sm:$0xf]
    %v475 = vld [vmem:[#allocation8 + $0x108] sm:$0xf]
    %v476 = vld [vmem:[#allocation8 + $0x10c] sm:$0xf]
    %v477 = vld [vmem:[#allocation8 + $0x110] sm:$0xf]
    %v478 = vld [vmem:[#allocation8 + $0x114] sm:$0xf]
    %v479 = vld [vmem:[#allocation8 + $0x118] sm:$0xf]
    %v480 = vld [vmem:[#allocation8 + $0x11c] sm:$0xf]
    %v481 = vld [vmem:[#allocation8 + $0x120] sm:$0xf]
    %v482 = vld [vmem:[#allocation8 + $0x124] sm:$0xf]
    %v483 = vld [vmem:[#allocation8 + $0x128] sm:$0xf]
    %v484 = vld [vmem:[#allocation8 + $0x12c] sm:$0xf]
    %v485 = vld [vmem:[#allocation8 + $0x130] sm:$0xf]
    %v486 = vld [vmem:[#allocation8 + $0x134] sm:$0xf]
    %v487 = vld [vmem:[#allocation8 + $0x138] sm:$0xf]
    %v488 = vld [vmem:[#allocation8 + $0x13c] sm:$0xf]
    %v489 = vld [vmem:[#allocation8 + $0x140] sm:$0xf]
    %v490 = vld [vmem:[#allocation8 + $0x144] sm:$0xf]
    %v491 = vld [vmem:[#allocation8 + $0x148] sm:$0xf]
    %v492 = vld [vmem:[#allocation8 + $0x14c] sm:$0xf]
    %v493 = vld [vmem:[#allocation8 + $0x150] sm:$0xf]
    %v494 = vld [vmem:[#allocation8 + $0x154] sm:$0xf]
    %v495 = vld [vmem:[#allocation8 + $0x158] sm:$0xf]
    %v496 = vld [vmem:[#allocation8 + $0x15c] sm:$0xf]
    %v497 = vld [vmem:[#allocation8 + $0x160] sm:$0xf]
    %v498 = vld [vmem:[#allocation8 + $0x164] sm:$0xf]
    %v499 = vld [vmem:[#allocation8 + $0x168] sm:$0xf]
    %v500 = vld [vmem:[#allocation8 + $0x16c] sm:$0xf]
    %v501 = vld [vmem:[#allocation8 + $0x170] sm:$0xf]
    %v502 = vld [vmem:[#allocation8 + $0x174] sm:$0xf]
    %v503 = vld [vmem:[#allocation8 + $0x178] sm:$0xf]
    %v504 = vld [vmem:[#allocation8 + $0x17c] sm:$0xf]
    %v505 = vld [vmem:[#allocation8 + $0x180] sm:$0xf]
    %v506 = vld [vmem:[#allocation8 + $0x184] sm:$0xf]
    %v507 = vld [vmem:[#allocation8 + $0x188] sm:$0xf]
    %v508 = vld [vmem:[#allocation8 + $0x18c] sm:$0xf]
    %v509 = vld [vmem:[#allocation8 + $0x190] sm:$0xf]
    %v510 = vld [vmem:[#allocation8 + $0x194] sm:$0xf]
    %v511 = vld [vmem:[#allocation8 + $0x198] sm:$0xf]
    %v512 = vld [vmem:[#allocation8 + $0x19c] sm:$0xf]
    %v513 = vld [vmem:[#allocation8 + $0x1a0] sm:$0xf]
    %v514 = vld [vmem:[#allocation8 + $0x1a4] sm:$0xf]
    %v515 = vld [vmem:[#allocation8 + $0x1a8] sm:$0xf]
    %v516 = vld [vmem:[#allocation8 + $0x1ac] sm:$0xf]
    %v517 = vld [vmem:[#allocation8 + $0x1b0] sm:$0xf]
    %v518 = vld [vmem:[#allocation8 + $0x1b4] sm:$0xf]
    %v519 = vld [vmem:[#allocation8 + $0x1b8] sm:$0xf]
    %v520 = vld [vmem:[#allocation8 + $0x1bc] sm:$0xf]
    %v521 = vld [vmem:[#allocation8 + $0x1c0] sm:$0xf]
    %v522 = vld [vmem:[#allocation8 + $0x1c4] sm:$0xf]
    %v523 = vld [vmem:[#allocation8 + $0x1c8] sm:$0xf]
    %v524 = vld [vmem:[#allocation8 + $0x1cc] sm:$0xf]
    %v525 = vld [vmem:[#allocation8 + $0x1d0] sm:$0xf]
    %v526 = vld [vmem:[#allocation8 + $0x1d4] sm:$0xf]
    %v527 = vld [vmem:[#allocation8 + $0x1d8] sm:$0xf]
    %v528 = vld [vmem:[#allocation8 + $0x1dc] sm:$0xf]
    %v529 = vld [vmem:[#allocation8 + $0x1e0] sm:$0xf]
    %v530 = vld [vmem:[#allocation8 + $0x1e4] sm:$0xf]
    %v531 = vld [vmem:[#allocation8 + $0x1e8] sm:$0xf]
    %v532 = vld [vmem:[#allocation8 + $0x1ec] sm:$0xf]
    %v533 = vld [vmem:[#allocation8 + $0x1f0] sm:$0xf]
    %v534 = vld [vmem:[#allocation8 + $0x1f4] sm:$0xf]
    %v535 = vld [vmem:[#allocation8 + $0x1f8] sm:$0xf]
    %v536 = vld [vmem:[#allocation8 + $0x1fc] sm:$0xf]
    %v537 = vld [vmem:[%s3] sm:$0x1]
    %v539 = vlaneseq
    %v540 = vshrl.u32 %v539, 7
    %v541 = vsub.s32 0, %v540
    %v542 = vrot.slane %v537, %v541
    %v672 = vunpack.c.l.b16 %v409
    %v673 = vunpack.c.l.b16 %v410
    %v674 = vunpack.c.l.b16 %v411
    %v675 = vunpack.c.l.b16 %v412
    %v676 = vunpack.c.l.b16 %v413
    %v677 = vunpack.c.l.b16 %v414
    %v678 = vunpack.c.l.b16 %v415
    %v679 = vunpack.c.l.b16 %v416
    %v680 = vunpack.c.l.b16 %v417
    %v681 = vunpack.c.l.b16 %v418
    %v682 = vunpack.c.l.b16 %v419
    %v683 = vunpack.c.l.b16 %v420
    %v684 = vunpack.c.l.b16 %v421
    %v685 = vunpack.c.l.b16 %v422
    %v686 = vunpack.c.l.b16 %v423
    %v687 = vunpack.c.l.b16 %v424
    %v688 = vunpack.c.l.b16 %v425
    %v689 = vunpack.c.l.b16 %v426
    %v690 = vunpack.c.l.b16 %v427
    %v691 = vunpack.c.l.b16 %v428
    %v692 = vunpack.c.l.b16 %v429
    %v693 = vunpack.c.l.b16 %v430
    %v694 = vunpack.c.l.b16 %v431
    %v695 = vunpack.c.l.b16 %v432
    %v696 = vunpack.c.l.b16 %v433
    %v697 = vunpack.c.l.b16 %v434
    %v698 = vunpack.c.l.b16 %v435
    %v699 = vunpack.c.l.b16 %v436
    %v700 = vunpack.c.l.b16 %v437
    %v701 = vunpack.c.l.b16 %v438
    %v702 = vunpack.c.l.b16 %v439
    %v703 = vunpack.c.l.b16 %v440
    %v704 = vunpack.c.l.b16 %v441
    %v705 = vunpack.c.l.b16 %v442
    %v706 = vunpack.c.l.b16 %v443
    %v707 = vunpack.c.l.b16 %v444
    %v708 = vunpack.c.l.b16 %v445
    %v709 = vunpack.c.l.b16 %v446
    %v710 = vunpack.c.l.b16 %v447
    %v711 = vunpack.c.l.b16 %v448
    %v712 = vunpack.c.l.b16 %v449
    %v713 = vunpack.c.l.b16 %v450
    %v714 = vunpack.c.l.b16 %v451
    %v715 = vunpack.c.l.b16 %v452
    %v716 = vunpack.c.l.b16 %v453
    %v717 = vunpack.c.l.b16 %v454
    %v718 = vunpack.c.l.b16 %v455
    %v719 = vunpack.c.l.b16 %v456
    %v720 = vunpack.c.l.b16 %v457
    %v721 = vunpack.c.l.b16 %v458
    %v722 = vunpack.c.l.b16 %v459
    %v723 = vunpack.c.l.b16 %v460
    %v724 = vunpack.c.l.b16 %v461
    %v725 = vunpack.c.l.b16 %v462
    %v726 = vunpack.c.l.b16 %v463
    %v727 = vunpack.c.l.b16 %v464
    %v728 = vunpack.c.l.b16 %v465
    %v729 = vunpack.c.l.b16 %v466
    %v730 = vunpack.c.l.b16 %v467
    %v731 = vunpack.c.l.b16 %v468
    %v732 = vunpack.c.l.b16 %v469
    %v733 = vunpack.c.l.b16 %v470
    %v734 = vunpack.c.l.b16 %v471
    %v735 = vunpack.c.l.b16 %v472
    %v736 = vunpack.c.l.b16 %v473
    %v737 = vunpack.c.l.b16 %v474
    %v738 = vunpack.c.l.b16 %v475
    %v739 = vunpack.c.l.b16 %v476
    %v740 = vunpack.c.l.b16 %v477
    %v741 = vunpack.c.l.b16 %v478
    %v742 = vunpack.c.l.b16 %v479
    %v743 = vunpack.c.l.b16 %v480
    %v744 = vunpack.c.l.b16 %v481
    %v745 = vunpack.c.l.b16 %v482
    %v746 = vunpack.c.l.b16 %v483
    %v747 = vunpack.c.l.b16 %v484
    %v748 = vunpack.c.l.b16 %v485
    %v749 = vunpack.c.l.b16 %v486
    %v750 = vunpack.c.l.b16 %v487
    %v751 = vunpack.c.l.b16 %v488
    %v752 = vunpack.c.l.b16 %v489
    %v753 = vunpack.c.l.b16 %v490
    %v754 = vunpack.c.l.b16 %v491
    %v755 = vunpack.c.l.b16 %v492
    %v756 = vunpack.c.l.b16 %v493
    %v757 = vunpack.c.l.b16 %v494
    %v758 = vunpack.c.l.b16 %v495
    %v759 = vunpack.c.l.b16 %v496
    %v760 = vunpack.c.l.b16 %v497
    %v761 = vunpack.c.l.b16 %v498
    %v762 = vunpack.c.l.b16 %v499
    %v763 = vunpack.c.l.b16 %v500
    %v764 = vunpack.c.l.b16 %v501
    %v765 = vunpack.c.l.b16 %v502
    %v766 = vunpack.c.l.b16 %v503
    %v767 = vunpack.c.l.b16 %v504
    %v768 = vunpack.c.l.b16 %v505
    %v769 = vunpack.c.l.b16 %v506
    %v770 = vunpack.c.l.b16 %v507
    %v771 = vunpack.c.l.b16 %v508
    %v772 = vunpack.c.l.b16 %v509
    %v773 = vunpack.c.l.b16 %v510
    %v774 = vunpack.c.l.b16 %v511
    %v775 = vunpack.c.l.b16 %v512
    %v776 = vunpack.c.l.b16 %v513
    %v777 = vunpack.c.l.b16 %v514
    %v778 = vunpack.c.l.b16 %v515
    %v779 = vunpack.c.l.b16 %v516
    %v780 = vunpack.c.l.b16 %v517
    %v781 = vunpack.c.l.b16 %v518
    %v782 = vunpack.c.l.b16 %v519
    %v783 = vunpack.c.l.b16 %v520
    %v784 = vunpack.c.l.b16 %v521
    %v785 = vunpack.c.l.b16 %v522
    %v786 = vunpack.c.l.b16 %v523
    %v787 = vunpack.c.l.b16 %v524
    %v788 = vunpack.c.l.b16 %v525
    %v789 = vunpack.c.l.b16 %v526
    %v790 = vunpack.c.l.b16 %v527
    %v791 = vunpack.c.l.b16 %v528
    %v792 = vunpack.c.l.b16 %v529
    %v793 = vunpack.c.l.b16 %v530
    %v794 = vunpack.c.l.b16 %v531
    %v795 = vunpack.c.l.b16 %v532
    %v796 = vunpack.c.l.b16 %v533
    %v797 = vunpack.c.l.b16 %v534
    %v798 = vunpack.c.l.b16 %v535
    %v799 = vunpack.c.l.b16 %v536
    %v800 = vpack.c.b16 %v673, %v672
    %v801 = vpack.c.b16 %v675, %v674
    %v802 = vpack.c.b16 %v677, %v676
    %v803 = vpack.c.b16 %v679, %v678
    %v804 = vpack.c.b16 %v681, %v680
    %v805 = vpack.c.b16 %v683, %v682
    %v806 = vpack.c.b16 %v685, %v684
    %v807 = vpack.c.b16 %v687, %v686
    %v808 = vpack.c.b16 %v689, %v688
    %v809 = vpack.c.b16 %v691, %v690
    %v810 = vpack.c.b16 %v693, %v692
    %v811 = vpack.c.b16 %v695, %v694
    %v812 = vpack.c.b16 %v697, %v696
    %v813 = vpack.c.b16 %v699, %v698
    %v814 = vpack.c.b16 %v701, %v700
    %v815 = vpack.c.b16 %v703, %v702
    %v816 = vpack.c.b16 %v705, %v704
    %v817 = vpack.c.b16 %v707, %v706
    %v818 = vpack.c.b16 %v709, %v708
    %v819 = vpack.c.b16 %v711, %v710
    %v820 = vpack.c.b16 %v713, %v712
    %v821 = vpack.c.b16 %v715, %v714
    %v822 = vpack.c.b16 %v717, %v716
    %v823 = vpack.c.b16 %v719, %v718
    %v824 = vpack.c.b16 %v721, %v720
    %v825 = vpack.c.b16 %v723, %v722
    %v826 = vpack.c.b16 %v725, %v724
    %v827 = vpack.c.b16 %v727, %v726
    %v828 = vpack.c.b16 %v729, %v728
    %v829 = vpack.c.b16 %v731, %v730
    %v830 = vpack.c.b16 %v733, %v732
    %v831 = vpack.c.b16 %v735, %v734
    %v832 = vpack.c.b16 %v737, %v736
    %v833 = vpack.c.b16 %v739, %v738
    %v834 = vpack.c.b16 %v741, %v740
    %v835 = vpack.c.b16 %v743, %v742
    %v836 = vpack.c.b16 %v745, %v744
    %v837 = vpack.c.b16 %v747, %v746
    %v838 = vpack.c.b16 %v749, %v748
    %v839 = vpack.c.b16 %v751, %v750
    %v840 = vpack.c.b16 %v753, %v752
    %v841 = vpack.c.b16 %v755, %v754
    %v842 = vpack.c.b16 %v757, %v756
    %v843 = vpack.c.b16 %v759, %v758
    %v844 = vpack.c.b16 %v761, %v760
    %v845 = vpack.c.b16 %v763, %v762
    %v846 = vpack.c.b16 %v765, %v764
    %v847 = vpack.c.b16 %v767, %v766
    %v848 = vpack.c.b16 %v769, %v768
    %v849 = vpack.c.b16 %v771, %v770
    %v850 = vpack.c.b16 %v773, %v772
    %v851 = vpack.c.b16 %v775, %v774
    %v852 = vpack.c.b16 %v777, %v776
    %v853 = vpack.c.b16 %v779, %v778
    %v854 = vpack.c.b16 %v781, %v780
    %v855 = vpack.c.b16 %v783, %v782
    %v856 = vpack.c.b16 %v785, %v784
    %v857 = vpack.c.b16 %v787, %v786
    %v858 = vpack.c.b16 %v789, %v788
    %v859 = vpack.c.b16 %v791, %v790
    %v860 = vpack.c.b16 %v793, %v792
    %v861 = vpack.c.b16 %v795, %v794
    %v862 = vpack.c.b16 %v797, %v796
    %v863 = vpack.c.b16 %v799, %v798
    %928 = vmatprep.subr.bf16.mxu0 0
    %929 = vmatpush1.bf16.msra.mxu0 %v800
    %930 = vmatprep.subr.bf16.mxu0 0
    %931 = vmatpush1.bf16.msra.mxu0 %v801
    %932 = vmatprep.subr.bf16.mxu0 0
    %933 = vmatpush1.bf16.msra.mxu0 %v802
    %934 = vmatprep.subr.bf16.mxu0 0
    %935 = vmatpush1.bf16.msra.mxu0 %v803
    %936 = vmatprep.subr.bf16.mxu0 0
    %937 = vmatpush1.bf16.msra.mxu0 %v804
    %938 = vmatprep.subr.bf16.mxu0 0
    %939 = vmatpush1.bf16.msra.mxu0 %v805
    %940 = vmatprep.subr.bf16.mxu0 0
    %941 = vmatpush1.bf16.msra.mxu0 %v806
    %942 = vmatprep.subr.bf16.mxu0 0
    %943 = vmatpush1.bf16.msra.mxu0 %v807
    %944 = vmatprep.subr.bf16.mxu0 0
    %945 = vmatpush1.bf16.msra.mxu0 %v808
    %946 = vmatprep.subr.bf16.mxu0 0
    %947 = vmatpush1.bf16.msra.mxu0 %v809
    %948 = vmatprep.subr.bf16.mxu0 0
    %949 = vmatpush1.bf16.msra.mxu0 %v810
    %950 = vmatprep.subr.bf16.mxu0 0
    %951 = vmatpush1.bf16.msra.mxu0 %v811
    %952 = vmatprep.subr.bf16.mxu0 0
    %953 = vmatpush1.bf16.msra.mxu0 %v812
    %954 = vmatprep.subr.bf16.mxu0 0
    %955 = vmatpush1.bf16.msra.mxu0 %v813
    %956 = vmatprep.subr.bf16.mxu0 0
    %957 = vmatpush1.bf16.msra.mxu0 %v814
    %958 = vmatprep.subr.bf16.mxu0 0
    %959 = vmatpush1.bf16.msra.mxu0 %v815
    %960 = vmatprep.mubr.bf16.mxu0 %v402
    %961 = vmatmul.mubr.bf16.gmra.mrb[0].mxu0 %v401
    %v962 = vpop.f32.mrb[0].mxu0
    %v963 = vadd.f32 %v542, %v962
    %v964 = vpop.f32.mrb[0].mxu0
    %v965 = vpop.f32.mrb[0].mxu0
    %v966 = vadd.f32 %v542, %v965
    %v967 = vpop.f32.mrb[0].mxu0
    %968 = vdwg.mxu0
    %969 = vmatprep.subr.bf16.mxu0 0
    %970 = vmatpush1.bf16.msra.mxu0 %v816
    %971 = vmatprep.subr.bf16.mxu0 0
    %972 = vmatpush1.bf16.msra.mxu0 %v817
    %973 = vmatprep.subr.bf16.mxu0 0
    %974 = vmatpush1.bf16.msra.mxu0 %v818
    %975 = vmatprep.subr.bf16.mxu0 0
    %976 = vmatpush1.bf16.msra.mxu0 %v819
    %977 = vmatprep.subr.bf16.mxu0 0
    %978 = vmatpush1.bf16.msra.mxu0 %v820
    %979 = vmatprep.subr.bf16.mxu0 0
    %980 = vmatpush1.bf16.msra.mxu0 %v821
    %981 = vmatprep.subr.bf16.mxu0 0
    %982 = vmatpush1.bf16.msra.mxu0 %v822
    %983 = vmatprep.subr.bf16.mxu0 0
    %984 = vmatpush1.bf16.msra.mxu0 %v823
    %985 = vmatprep.subr.bf16.mxu0 0
    %986 = vmatpush1.bf16.msra.mxu0 %v824
    %987 = vmatprep.subr.bf16.mxu0 0
    %988 = vmatpush1.bf16.msra.mxu0 %v825
    %989 = vmatprep.subr.bf16.mxu0 0
    %990 = vmatpush1.bf16.msra.mxu0 %v826
    %991 = vmatprep.subr.bf16.mxu0 0
    %992 = vmatpush1.bf16.msra.mxu0 %v827
    %993 = vmatprep.subr.bf16.mxu0 0
    %994 = vmatpush1.bf16.msra.mxu0 %v828
    %995 = vmatprep.subr.bf16.mxu0 0
    %996 = vmatpush1.bf16.msra.mxu0 %v829
    %997 = vmatprep.subr.bf16.mxu0 0
    %998 = vmatpush1.bf16.msra.mxu0 %v830
    %999 = vmatprep.subr.bf16.mxu0 0
    %1000 = vmatpush1.bf16.msra.mxu0 %v831
    %1001 = vmatprep.mubr.bf16.mxu0 %v404
    %1002 = vmatmul.mubr.bf16.gmra.mrb[0].mxu0 %v403
    %v1003 = vpop.f32.mrb[0].mxu0
    %v1004 = vadd.f32 %v963, %v1003
    %v1005 = vpop.f32.mrb[0].mxu0
    %v1006 = vpop.f32.mrb[0].mxu0
    %v1007 = vadd.f32 %v966, %v1006
    %v1008 = vpop.f32.mrb[0].mxu0
    %1009 = vdwg.mxu0
    %1010 = vmatprep.subr.bf16.mxu0 0
    %1011 = vmatpush1.bf16.msra.mxu0 %v832
    %1012 = vmatprep.subr.bf16.mxu0 0
    %1013 = vmatpush1.bf16.msra.mxu0 %v833
    %1014 = vmatprep.subr.bf16.mxu0 0
    %1015 = vmatpush1.bf16.msra.mxu0 %v834
    %1016 = vmatprep.subr.bf16.mxu0 0
    %1017 = vmatpush1.bf16.msra.mxu0 %v835
    %1018 = vmatprep.subr.bf16.mxu0 0
    %1019 = vmatpush1.bf16.msra.mxu0 %v836
    %1020 = vmatprep.subr.bf16.mxu0 0
    %1021 = vmatpush1.bf16.msra.mxu0 %v837
    %1022 = vmatprep.subr.bf16.mxu0 0
    %1023 = vmatpush1.bf16.msra.mxu0 %v838
    %1024 = vmatprep.subr.bf16.mxu0 0
    %1025 = vmatpush1.bf16.msra.mxu0 %v839
    %1026 = vmatprep.subr.bf16.mxu0 0
    %1027 = vmatpush1.bf16.msra.mxu0 %v840
    %1028 = vmatprep.subr.bf16.mxu0 0
    %1029 = vmatpush1.bf16.msra.mxu0 %v841
    %1030 = vmatprep.subr.bf16.mxu0 0
    %1031 = vmatpush1.bf16.msra.mxu0 %v842
    %1032 = vmatprep.subr.bf16.mxu0 0
    %1033 = vmatpush1.bf16.msra.mxu0 %v843
    %1034 = vmatprep.subr.bf16.mxu0 0
    %1035 = vmatpush1.bf16.msra.mxu0 %v844
    %1036 = vmatprep.subr.bf16.mxu0 0
    %1037 = vmatpush1.bf16.msra.mxu0 %v845
    %1038 = vmatprep.subr.bf16.mxu0 0
    %1039 = vmatpush1.bf16.msra.mxu0 %v846
    %1040 = vmatprep.subr.bf16.mxu0 0
    %1041 = vmatpush1.bf16.msra.mxu0 %v847
    %1042 = vmatprep.mubr.bf16.mxu0 %v406
    %1043 = vmatmul.mubr.bf16.gmra.mrb[0].mxu0 %v405
    %v1044 = vpop.f32.mrb[0].mxu0
    %v1045 = vadd.f32 %v1004, %v1044
    %v1046 = vpop.f32.mrb[0].mxu0
    %v1047 = vpop.f32.mrb[0].mxu0
    %v1048 = vadd.f32 %v1007, %v1047
    %v1049 = vpop.f32.mrb[0].mxu0
    %1050 = vdwg.mxu0
    %1051 = vmatprep.subr.bf16.mxu0 0
    %1052 = vmatpush1.bf16.msra.mxu0 %v848
    %1053 = vmatprep.subr.bf16.mxu0 0
    %1054 = vmatpush1.bf16.msra.mxu0 %v849
    %1055 = vmatprep.subr.bf16.mxu0 0
    %1056 = vmatpush1.bf16.msra.mxu0 %v850
    %1057 = vmatprep.subr.bf16.mxu0 0
    %1058 = vmatpush1.bf16.msra.mxu0 %v851
    %1059 = vmatprep.subr.bf16.mxu0 0
    %1060 = vmatpush1.bf16.msra.mxu0 %v852
    %1061 = vmatprep.subr.bf16.mxu0 0
    %1062 = vmatpush1.bf16.msra.mxu0 %v853
    %1063 = vmatprep.subr.bf16.mxu0 0
    %1064 = vmatpush1.bf16.msra.mxu0 %v854
    %1065 = vmatprep.subr.bf16.mxu0 0
    %1066 = vmatpush1.bf16.msra.mxu0 %v855
    %1067 = vmatprep.subr.bf16.mxu0 0
    %1068 = vmatpush1.bf16.msra.mxu0 %v856
    %1069 = vmatprep.subr.bf16.mxu0 0
    %1070 = vmatpush1.bf16.msra.mxu0 %v857
    %1071 = vmatprep.subr.bf16.mxu0 0
    %1072 = vmatpush1.bf16.msra.mxu0 %v858
    %1073 = vmatprep.subr.bf16.mxu0 0
    %1074 = vmatpush1.bf16.msra.mxu0 %v859
    %1075 = vmatprep.subr.bf16.mxu0 0
    %1076 = vmatpush1.bf16.msra.mxu0 %v860
    %1077 = vmatprep.subr.bf16.mxu0 0
    %1078 = vmatpush1.bf16.msra.mxu0 %v861
    %1079 = vmatprep.subr.bf16.mxu0 0
    %1080 = vmatpush1.bf16.msra.mxu0 %v862
    %1081 = vmatprep.subr.bf16.mxu0 0
    %1082 = vmatpush1.bf16.msra.mxu0 %v863
    %1083 = vmatprep.mubr.bf16.mxu0 %v408
    %1084 = vmatmul.mubr.bf16.gmra.mrb[0].mxu0 %v407
    %v1085 = vpop.f32.mrb[0].mxu0
    %v1086 = vadd.f32 %v1045, %v1085
    %v1087 = vpop.f32.mrb[0].mxu0
    %v1088 = vpop.f32.mrb[0].mxu0
    %v1089 = vadd.f32 %v1048, %v1088
    %v1090 = vpop.f32.mrb[0].mxu0
    %1091 = vdwg.mxu0
    %v1092 = vmax.f32 %v1086, 0.0
    %v1093 = vmax.f32 %v1089, 0.0
    %v1094 = vpack.c.bf16 %v1093, %v1092
    %v1095 = vld [vmem:[%s4] sm:$0x1]
    %s1096 = sld [smem:[#allocation2]]
    %v1097 = vstv %s1096
    %1098 = vmatprep.subr.bf16.mxu0 0
    %1099 = vmatpush1.bf16.xpose.msra.mxu0 %v1094
    %1100 = vmatprep.subr.bf16.mxu0 0
    %1101 = vmatpush1.bf16.xpose.msra.mxu0 0
    %1102 = vmatprep.subr.bf16.mxu0 0
    %1103 = vmatpush1.bf16.xpose.msra.mxu0 0
    %1104 = vmatprep.subr.bf16.mxu0 0
    %1105 = vmatpush1.bf16.xpose.msra.mxu0 0
    %1106 = vmatprep.subr.bf16.mxu0 0
    %1107 = vmatpush1.bf16.xpose.msra.mxu0 0
    %1108 = vmatprep.subr.bf16.mxu0 0
    %1109 = vmatpush1.bf16.xpose.msra.mxu0 0
    %1110 = vmatprep.subr.bf16.mxu0 0
    %1111 = vmatpush1.bf16.xpose.msra.mxu0 0
    %1112 = vmatprep.subr.bf16.mxu0 0
    %1113 = vmatpush1.bf16.xpose.msra.mxu0 0
    %1114 = vmatprep.subr.bf16.mxu0 0
    %1115 = vmatpush1.bf16.xpose.msra.mxu0 0
    %1116 = vmatprep.subr.bf16.mxu0 0
    %1117 = vmatpush1.bf16.xpose.msra.mxu0 0
    %1118 = vmatprep.subr.bf16.mxu0 0
    %1119 = vmatpush1.bf16.xpose.msra.mxu0 0
    %1120 = vmatprep.subr.bf16.mxu0 0
    %1121 = vmatpush1.bf16.xpose.msra.mxu0 0
    %1122 = vmatprep.subr.bf16.mxu0 0
    %1123 = vmatpush1.bf16.xpose.msra.mxu0 0
    %1124 = vmatprep.subr.bf16.mxu0 0
    %1125 = vmatpush1.bf16.xpose.msra.mxu0 0
    %1126 = vmatprep.subr.bf16.mxu0 0
    %1127 = vmatpush1.bf16.xpose.msra.mxu0 0
    %1128 = vmatprep.subr.bf16.mxu0 0
    %1129 = vmatpush1.bf16.xpose.msra.mxu0 0
    %1130 = vmatprep.mubr.bf16.mxu0 0
    %1131 = vmatmul.mubr.bf16.gmra.mrb[0].mxu0 %v1095
    %v1132 = vpop.f32.mrb[0].mxu0
    %v1133 = vadd.f32 %v1097, %v1132
    %v1134 = vpop.f32.mrb[0].mxu0
    %v1135 = vpop.f32.mrb[0].mxu0
    %v1136 = vpop.f32.mrb[0].mxu0
    %1137 = vdwg.mxu0
    %vm1138 = vcmask 122880
    %1139 = vst.msk [vmem:[#allocation9] sm:$0x1] %vm1138, %v1133
    // Predicated region
    $region38: #{tpu_custom_call.1} parent=1 // pred_check
      _
    $region39: #{tpu_custom_call.1} parent=1 // pred_check_branch
      %1141 = sbr.rel (0) target = $region41
    $region40: #{tpu_custom_call.1} parent=1 // pred_region
      %s1143 = ssub.s32 16, 16
      %1144 = vsyncadd [#allocation5], %s1143
      %s1146 = sshll.u32 [#allocation9], 4
      %s1147 = int_to_ptr.vmem [resolvable:$true] %s1146
      %1149 = dma.vmem_to_hbm [thread:$0]  %s1147, 16, %s6, [#allocation5]
    $region41: #{tpu_custom_call.1} parent=1 // pred_fallthru
      _
    // Predicated region
    $region42: #{tpu_custom_call.1} parent=1 // pred_check
      _
    $region43: #{tpu_custom_call.1} parent=1 // pred_check_branch
      %1151 = sbr.rel (0) target = $region45
    $region44: #{tpu_custom_call.1} parent=1 // pred_region
      %1152 = dma.done [#allocation5], 16
    $region45: #{tpu_custom_call.1} parent=1 // pred_fallthru
      _
    %1153 = vsyncpa [#allocation4], 1
    %1154 = vsyncpa [#allocation7], 1
    %1155 = vsyncpa [#allocation5], 1

</llo_original>
